<compile_context>
chip_gen: v7x
topology: tpu7x:2x2x1
jax: 0.10.0
libtpu: 0.0.40
codegen_flags: <defaults>
</compile_context>

<pallas_src>
import math

import jax
import jax.numpy as jnp
from jax.experimental import pallas as pl
from jax.experimental.pallas import tpu as pltpu

# Conservative VMEM budgeting across v5e (16 MiB scoped default), v6e (32 MiB
# default / 128 MiB physical) and v7x (32 MiB default / 64 MiB physical):
_VMEM_LIMIT_BYTES = 32 * 1024 * 1024      # explicit scoped-VMEM limit
_WORKING_SET_TARGET = 16 * 1024 * 1024    # double-buffered working-set target
_WORKING_SET_CEILING = 24 * 1024 * 1024   # hard ceiling before falling back
_MAX_ROW_TILE = 1024                      # ~85% of HBM roofline by ~512-1024 rows


def _sublane_multiple(*dtypes):
    """Native sublane granularity: 8 rows for 4-byte, 16 for 2-byte, 32 for 1-byte."""
    itemsize = min(jnp.dtype(d).itemsize for d in dtypes)
    return max(8, 32 // max(itemsize, 1))


def _pick_row_tile(n_rows, bytes_per_row_db, mult):
    """Largest row tile (multiple of `mult`, <= _MAX_ROW_TILE) whose
    double-buffered footprint stays under the VMEM working-set target."""
    fit = max(_WORKING_SET_TARGET // max(bytes_per_row_db, 1), 1)
    tile = (min(fit, _MAX_ROW_TILE) // mult) * mult
    if tile == 0:
        tile = min(mult, n_rows)  # minimal legal tile; caller checks the ceiling
    if tile >= n_rows:
        return n_rows             # single full-extent block (always legal)
    return tile


def _concat2d_kernel(dx, dy):
    """Write x into lanes [0, dx) and y into lanes [dx, dx+dy) of each block."""
    def kernel(x_ref, y_ref, o_ref):
        o_ref[:, 0:dx] = x_ref[...].astype(o_ref.dtype)
        o_ref[:, dx:dx + dy] = y_ref[...].astype(o_ref.dtype)
    return kernel


def _concat3d_kernel(sx, sy):
    """Seam on the sublane (second-minor) axis; lanes stay full-width."""
    def kernel(x_ref, y_ref, o_ref):
        o_ref[:, 0:sx, :] = x_ref[...].astype(o_ref.dtype)
        o_ref[:, sx:sx + sy, :] = y_ref[...].astype(o_ref.dtype)
    return kernel


def _concat_2d(x2, y2, out_dtype):
    """(lead, dx) ++ (lead, dy) -> (lead, dx+dy) along lanes."""
    lead, dx = x2.shape
    _, dy = y2.shape
    out_isz = jnp.dtype(out_dtype).itemsize
    mult = _sublane_multiple(x2.dtype, y2.dtype, out_dtype)
    bytes_per_row_db = 2 * (dx * x2.dtype.itemsize + dy * y2.dtype.itemsize
                            + (dx + dy) * out_isz)
    row_tile = _pick_row_tile(lead, bytes_per_row_db, mult)
    if row_tile * bytes_per_row_db > _WORKING_SET_CEILING:
        return None  # rows too wide to stage through VMEM; caller falls back

    out_nbytes = lead * (dx + dy) * out_isz
    grid = (pl.cdiv(lead, row_tile),)
    return pl.pallas_call(
        _concat2d_kernel(dx, dy),
        out_shape=jax.ShapeDtypeStruct((lead, dx + dy), out_dtype),
        grid=grid,
        in_specs=[
            pl.BlockSpec((row_tile, dx), lambda i: (i, 0)),
            pl.BlockSpec((row_tile, dy), lambda i: (i, 0)),
        ],
        out_specs=pl.BlockSpec((row_tile, dx + dy), lambda i: (i, 0)),
        compiler_params=pltpu.CompilerParams(
            # Row axis is independent per step: shards across TensorCores.
            dimension_semantics=("parallel",),
            vmem_limit_bytes=_VMEM_LIMIT_BYTES),
        cost_estimate=pl.CostEstimate(
            flops=0, transcendentals=0,
            bytes_accessed=int(x2.nbytes) + int(y2.nbytes) + int(out_nbytes)),
    )(x2, y2)


def _concat_3d(x3, y3, out_dtype):
    """(lead, sx, trail) ++ (lead, sy, trail) -> (lead, sx+sy, trail) along dim 1."""
    lead, sx, trail = x3.shape
    _, sy, _ = y3.shape
    out_isz = jnp.dtype(out_dtype).itemsize
    bytes_per_grp_db = 2 * trail * (sx * x3.dtype.itemsize + sy * y3.dtype.itemsize
                                    + (sx + sy) * out_isz)
    grp_tile = _pick_row_tile(lead, bytes_per_grp_db, 1)
    if grp_tile * bytes_per_grp_db > _WORKING_SET_CEILING:
        return None

    out_nbytes = lead * (sx + sy) * trail * out_isz
    grid = (pl.cdiv(lead, grp_tile),)
    return pl.pallas_call(
        _concat3d_kernel(sx, sy),
        out_shape=jax.ShapeDtypeStruct((lead, sx + sy, trail), out_dtype),
        grid=grid,
        in_specs=[
            pl.BlockSpec((grp_tile, sx, trail), lambda i: (i, 0, 0)),
            pl.BlockSpec((grp_tile, sy, trail), lambda i: (i, 0, 0)),
        ],
        out_specs=pl.BlockSpec((grp_tile, sx + sy, trail), lambda i: (i, 0, 0)),
        compiler_params=pltpu.CompilerParams(
            dimension_semantics=("parallel",),
            vmem_limit_bytes=_VMEM_LIMIT_BYTES),
        cost_estimate=pl.CostEstimate(
            flops=0, transcendentals=0,
            bytes_accessed=int(x3.nbytes) + int(y3.nbytes) + int(out_nbytes)),
    )(x3, y3)


def concat_forward(x, y, dim=-1):
    """Pallas equivalent of torch.cat((x, y), dim)."""
    assert x.ndim == y.ndim, "inputs must have the same rank"
    ndim = x.ndim
    axis = dim % ndim
    for a in range(ndim):
        if a != axis:
            assert x.shape[a] == y.shape[a], (
                f"non-concat dim {a} mismatch: {x.shape} vs {y.shape}")

    out_dtype = jnp.promote_types(x.dtype, y.dtype)
    out_shape = list(x.shape)
    out_shape[axis] = x.shape[axis] + y.shape[axis]

    lead = math.prod(x.shape[:axis])
    trail = math.prod(x.shape[axis + 1:])
    sx, sy = x.shape[axis], y.shape[axis]
    dx, dy = sx * trail, sy * trail

    # Narrow-width / degenerate escape hatch: sub-128-lane outputs (or empty
    # operands) are better served by XLA's concatenate.
    if dx + dy < 128 or dx == 0 or dy == 0 or lead == 0:
        return jnp.concatenate([x.astype(out_dtype), y.astype(out_dtype)], axis=axis)

    if dx % 128 != 0 and axis != ndim - 1 and trail >= 128:
        # 2-D flatten would put the seam mid-vreg (cross-lane rotates on every
        # y vreg + masked boundary stores).  Keep lanes == trail and put the
        # seam on the sublane axis instead.
        out3 = _concat_3d(x.reshape(lead, sx, trail),
                          y.reshape(lead, sy, trail), out_dtype)
        if out3 is not None:
            return out3.reshape(out_shape)

    out2 = _concat_2d(x.reshape(lead, dx), y.reshape(lead, dy), out_dtype)
    if out2 is not None:
        return out2.reshape(out_shape)

    # TODO(synk): direct HBM->HBM DMA (pl.ANY + make_async_copy) / column-tiled
    # path for rows too wide to stage through VMEM; fall back to XLA for now.
    return jnp.concatenate([x.astype(out_dtype), y.astype(out_dtype)], axis=axis)


class ConcatLayer:
    """Concatenate two tensors along the dim axis (forward of the torch module)."""

    def __init__(self, dim=-1):
        self.dim = dim

    def __call__(self, x, y):
        return concat_forward(x, y, self.dim)


if __name__ == "__main__":
    key = jax.random.PRNGKey(0)
    k1, k2, k3, k4, k5, k6 = jax.random.split(key, 6)

    cases = [
        # 1) dim=-1 feature concat, lane-aligned seam (2-D lane-dense path).
        (jax.random.normal(k1, (16, 256), jnp.float32),
         jax.random.normal(k2, (16, 128), jnp.float32), -1),
        # 2) channel concat on NCHW-style tensors; trail = 8*16 = 128,
        #    seam lane-aligned (2-D path).
        (jax.random.normal(k3, (2, 3, 8, 16), jnp.float32),
         jax.random.normal(k4, (2, 5, 8, 16), jnp.float32), 1),
        # 3) middle-axis concat with trail = 160: seam would be lane-misaligned
        #    under the 2-D flatten -> exercises the 3-D sublane-seam path.
        (jax.random.normal(k5, (2, 3, 160), jnp.float32),
         jax.random.normal(k6, (2, 5, 160), jnp.float32), 1),
    ]

    for x, y, dim in cases:
        out = jax.block_until_ready(ConcatLayer(dim)(x, y))
        ref = jnp.concatenate([x, y], axis=dim)
        assert out.shape == ref.shape, (out.shape, ref.shape)
        assert jnp.array_equal(out, ref), f"mismatch vs jnp.concatenate (dim={dim})"

    print("KERNEL_OK")
</pallas_src>

<mosaic_0001>
module attributes {stable_mosaic.version = 11 : i64} {
  func.func @kernel(%arg0: i32, %arg1: memref<16x256xf32, #tpu.memory_space<vmem>>, %arg2: memref<16x128xf32, #tpu.memory_space<vmem>>, %arg3: memref<16x384xf32, #tpu.memory_space<vmem>>) attributes {dimension_semantics = [#tpu.dimension_semantics<parallel>], iteration_bounds = array<i64: 1>, scalar_prefetch = 0 : i64, scratch_operands = 0 : i64, tpu.core_type = #tpu.core_type<tc>, window_params = [{transform_indices = @transform_0, window_bounds = array<i64: 16, 256>}, {transform_indices = @transform_1, window_bounds = array<i64: 16, 128>}, {transform_indices = @transform_2, window_bounds = array<i64: 16, 384>}]} {
    %c0 = arith.constant 0 : index
    %c0_0 = arith.constant 0 : index
    %0 = vector.load %arg1[%c0, %c0_0] : memref<16x256xf32, #tpu.memory_space<vmem>>, vector<16x256xf32>
    %c0_1 = arith.constant 0 : index
    %c0_2 = arith.constant 0 : index
    %1 = vector.load %arg3[%c0_1, %c0_2] : memref<16x384xf32, #tpu.memory_space<vmem>>, vector<16x256xf32>
    tpu.vector_store %arg3[%c0_1, %c0_2], %0 {strides = array<i32>} : memref<16x384xf32, #tpu.memory_space<vmem>>, vector<16x256xf32>,
    %c0_3 = arith.constant 0 : index
    %c0_4 = arith.constant 0 : index
    %2 = vector.load %arg2[%c0_3, %c0_4] : memref<16x128xf32, #tpu.memory_space<vmem>>, vector<16x128xf32>
    %c0_5 = arith.constant 0 : index
    %c256 = arith.constant 256 : index
    %3 = vector.load %arg3[%c0_5, %c256] : memref<16x384xf32, #tpu.memory_space<vmem>>, vector<16x128xf32>
    tpu.vector_store %arg3[%c0_5, %c256], %2 {strides = array<i32>} : memref<16x384xf32, #tpu.memory_space<vmem>>, vector<16x128xf32>,
    return
  }
  func.func @transform_0(%arg0: i32) -> (i32, i32) {
    %c0_i32 = arith.constant 0 : i32
    %c0_i32_0 = arith.constant 0 : i32
    return %arg0, %c0_i32 : i32, i32
  }
  func.func @transform_1(%arg0: i32) -> (i32, i32) {
    %c0_i32 = arith.constant 0 : i32
    %c0_i32_0 = arith.constant 0 : i32
    return %arg0, %c0_i32 : i32, i32
  }
  func.func @transform_2(%arg0: i32) -> (i32, i32) {
    %c0_i32 = arith.constant 0 : i32
    %c0_i32_0 = arith.constant 0 : i32
    return %arg0, %c0_i32 : i32, i32
  }
}

</mosaic_0001>

<llo_original>
// kernel: tpu_custom_call.1
$region0: #{tpu_custom_call.1}
  #allocation0 [shape = 'u32[]', space=smem, size = 0x4, offset = 0x4, fixed_abs, tag = 'smem constant byte address 0x4 - core index']
  #allocation1 [shape = 'u32[144,128]{1,0:T(1,128)}', space=vmem, size = 0x12000, scoped, tag = 'internal scratch']
  %s0 = inlined_call_operand.hbm [shape: f32[16,256], index: 0, kind: input, shape index: {}]
  %s1 = inlined_call_operand.hbm [shape: f32[16,128], index: 1, kind: input, shape index: {}]
  %s2 = inlined_call_operand.hbm [shape: f32[16,384], index: 2, kind: output, shape index: {}]
  %s3 = sld [smem:[#allocation0]]
  $region26: #{tpu_custom_call.1} parent=0
    _
  %s5 = ssub.s32 1, %s3
  %s6 = scalar_select 0, %s5, %s3
  $region1: #{tpu_custom_call.1} parent=0
    #allocation2 [shape = 'u8[16384]{0}', space=vmem, size = 0x4000, scoped, tag = 'input window, operand 0, single buffered']
    #allocation3 [shape = 's32[1]{0}', space=sflag, size = 0x4, scoped, tag = 'scoped memory for tpu_custom_call.1']
    #allocation4 [shape = 's32[1]{0}', space=sflag, size = 0x4, scoped, tag = 'scoped memory for tpu_custom_call.1']
    #allocation5 [shape = 'u8[8192]{0}', space=vmem, size = 0x2000, scoped, tag = 'input window, operand 1, single buffered']
    #allocation6 [shape = 's32[1]{0}', space=sflag, size = 0x4, scoped, tag = 'scoped memory for tpu_custom_call.1']
    #allocation7 [shape = 'u8[24576]{0}', space=vmem, size = 0x6000, scoped, tag = 'output window, operand 0, single buffered']
    %7 = vsyncpa [#allocation3], 0
    %8 = vsyncpa [#allocation6], 0
    %9 = vsyncpa [#allocation4], 0
    // Predicated region
    $region2: #{tpu_custom_call.1} parent=1 // pred_check
      _
    $region3: #{tpu_custom_call.1} parent=1 // pred_check_branch
      %11 = sbr.rel (0) target = $region5
    $region4: #{tpu_custom_call.1} parent=1 // pred_region
      %s13 = ssub.s32 512, 512
      %14 = vsyncadd [#allocation3], %s13
      %s15 = sshll.u32 [#allocation2], 4
      %s16 = int_to_ptr.vmem [resolvable:$true] %s15
      %21 = dma.hbm_to_vmem [thread:$0]  %s0, 512, %s16, [#allocation3], 256, 256, 16
    $region5: #{tpu_custom_call.1} parent=1 // pred_fallthru
      _
    // Predicated region
    $region6: #{tpu_custom_call.1} parent=1 // pred_check
      _
    $region7: #{tpu_custom_call.1} parent=1 // pred_check_branch
      %23 = sbr.rel (0) target = $region9
    $region8: #{tpu_custom_call.1} parent=1 // pred_region
      %s25 = ssub.s32 256, 256
      %26 = vsyncadd [#allocation6], %s25
      %s27 = sshll.u32 [#allocation5], 4
      %s28 = int_to_ptr.vmem [resolvable:$true] %s27
      %33 = dma.hbm_to_vmem [thread:$0]  %s1, 256, %s28, [#allocation6], 128, 128, 8
    $region9: #{tpu_custom_call.1} parent=1 // pred_fallthru
      _
    // Predicated region
    $region10: #{tpu_custom_call.1} parent=1 // pred_check
      _
    $region11: #{tpu_custom_call.1} parent=1 // pred_check_branch
      %35 = sbr.rel (0) target = $region13
    $region12: #{tpu_custom_call.1} parent=1 // pred_region
      %36 = dma.done [#allocation3], 512
    $region13: #{tpu_custom_call.1} parent=1 // pred_fallthru
      _
    // Predicated region
    $region14: #{tpu_custom_call.1} parent=1 // pred_check
      _
    $region15: #{tpu_custom_call.1} parent=1 // pred_check_branch
      %38 = sbr.rel (0) target = $region17
    $region16: #{tpu_custom_call.1} parent=1 // pred_region
      %39 = dma.done [#allocation6], 256
    $region17: #{tpu_custom_call.1} parent=1 // pred_fallthru
      _
    %v40 = vld [vmem:[#allocation2] sm:$0xff]
    %v41 = vld [vmem:[#allocation2 + $0x8] sm:$0xff]
    %v42 = vld [vmem:[#allocation2 + $0x10] sm:$0xff]
    %v43 = vld [vmem:[#allocation2 + $0x18] sm:$0xff]
    %44 = vst [vmem:[#allocation7] sm:$0xff] %v40
    %45 = vst [vmem:[#allocation7 + $0x8] sm:$0xff] %v41
    %46 = vst [vmem:[#allocation7 + $0x18] sm:$0xff] %v42
    %47 = vst [vmem:[#allocation7 + $0x20] sm:$0xff] %v43
    %v48 = vld [vmem:[#allocation5] sm:$0xff]
    %v49 = vld [vmem:[#allocation5 + $0x8] sm:$0xff]
    %50 = vst [vmem:[#allocation7 + $0x10] sm:$0xff] %v48
    %51 = vst [vmem:[#allocation7 + $0x28] sm:$0xff] %v49
    // Predicated region
    $region18: #{tpu_custom_call.1} parent=1 // pred_check
      _
    $region19: #{tpu_custom_call.1} parent=1 // pred_check_branch
      %53 = sbr.rel (0) target = $region21
    $region20: #{tpu_custom_call.1} parent=1 // pred_region
      %s55 = ssub.s32 768, 768
      %56 = vsyncadd [#allocation4], %s55
      %s57 = sshll.u32 [#allocation7], 4
      %s58 = int_to_ptr.vmem [resolvable:$true] %s57
      %63 = dma.vmem_to_hbm [thread:$0]  %s58, 768, %s2, [#allocation4], 384, 384, 24
    $region21: #{tpu_custom_call.1} parent=1 // pred_fallthru
      _
    // Predicated region
    $region22: #{tpu_custom_call.1} parent=1 // pred_check
      _
    $region23: #{tpu_custom_call.1} parent=1 // pred_check_branch
      %65 = sbr.rel (0) target = $region25
    $region24: #{tpu_custom_call.1} parent=1 // pred_region
      %66 = dma.done [#allocation4], 768
    $region25: #{tpu_custom_call.1} parent=1 // pred_fallthru
      _
    %67 = vsyncpa [#allocation3], 1
    %68 = vsyncpa [#allocation6], 1
    %69 = vsyncpa [#allocation4], 1

</llo_original>
